<compile_context>
chip_gen: v7x
topology: tpu7x:2x2x1
jax: 0.10.0
libtpu: 0.0.40
codegen_flags: <defaults>
</compile_context>

<pallas_src>
import numpy as np

import jax
import jax.numpy as jnp
from jax.experimental import pallas as pl
from jax.experimental.pallas import tpu as pltpu


IN_FEATURES = 6 * 6 * 6       # flattened NCHW input = 216
IN_FEATURES_PAD = 256         # lane-dense K for the conv GEMM
CONV_FEATURES = 210           # 96 + 54 + 24 + 36
CONV_FEATURES_PAD = 256       # lane-dense conv feature slab
HID1 = 512
HID2 = 256
OUT_PAD = 128                 # lane-dense output slab (n_actions live columns)


def _round_up(x, m):
    return ((x + m - 1) // m) * m


# ----------------------------------------------------------------------------
# Fused kernel: conv-GEMM + fc1 + fc2 + fc3 (bias + ReLU fused), all in VMEM.
# ----------------------------------------------------------------------------
def _net_fused_kernel(x_ref, wc_ref, bc_ref, w1_ref, b1_ref,
                      w2_ref, b2_ref, w3_ref, b3_ref, o_ref):
    f32 = jnp.float32
    x = x_ref[...]                                                  # (bm, 256)
    feat = jnp.dot(x, wc_ref[...], preferred_element_type=f32) + bc_ref[...]
    feat = jnp.maximum(feat, 0.0)                                   # (bm, 256)
    h = jnp.dot(feat, w1_ref[...], preferred_element_type=f32) + b1_ref[...]
    h = jnp.maximum(h, 0.0)                                         # (bm, 512)
    h = jnp.dot(h, w2_ref[...], preferred_element_type=f32) + b2_ref[...]
    h = jnp.maximum(h, 0.0)                                         # (bm, 256)
    out = jnp.dot(h, w3_ref[...], preferred_element_type=f32) + b3_ref[...]
    o_ref[...] = out.astype(o_ref.dtype)                            # (bm, 128)


def net_forward(packed, x, n_actions):
    """x: (B, 6, 6, 6) NCHW float32 -> (B, n_actions) float32."""
    bsz = x.shape[0]
    x2d = x.reshape(bsz, IN_FEATURES).astype(jnp.float32)

    # Batch-tile heuristic: always a multiple of 8 sublanes; large training
    # batches use 256/512-row tiles (>=2 grid steps so both v7x cores work).
    if bsz <= 8:
        bm = 8
    elif bsz <= 256:
        bm = _round_up(bsz, 8)
    elif bsz <= 1024:
        bm = 256
    else:
        bm = 512
    bsz_pad = _round_up(bsz, bm)
    grid = (bsz_pad // bm,)

    # Zero-pad (once, in the wrapper): batch -> bsz_pad rows, K 216 -> 256.
    # Padded rows/columns multiply zero weight rows, so results are unchanged;
    # padded batch rows are sliced away below (no cross-row reduction inside).
    x2d = jnp.pad(
        x2d, ((0, bsz_pad - bsz), (0, IN_FEATURES_PAD - IN_FEATURES)))

    out_pad = packed["w3"].shape[1]

    def const(i):                      # same block every grid step (resident)
        return (0, 0)

    in_specs = [
        pl.BlockSpec((bm, IN_FEATURES_PAD), lambda i: (i, 0)),
        pl.BlockSpec((IN_FEATURES_PAD, CONV_FEATURES_PAD), const),
        pl.BlockSpec((1, CONV_FEATURES_PAD), const),
        pl.BlockSpec((CONV_FEATURES_PAD, HID1), const),
        pl.BlockSpec((1, HID1), const),
        pl.BlockSpec((HID1, HID2), const),
        pl.BlockSpec((1, HID2), const),
        pl.BlockSpec((HID2, out_pad), const),
        pl.BlockSpec((1, out_pad), const),
    ]
    out_specs = pl.BlockSpec((bm, out_pad), lambda i: (i, 0))

    out = pl.pallas_call(
        _net_fused_kernel,
        out_shape=jax.ShapeDtypeStruct((bsz_pad, out_pad), jnp.float32),
        grid=grid,
        in_specs=in_specs,
        out_specs=out_specs,
        compiler_params=pltpu.CompilerParams(
            dimension_semantics=("parallel",)),
    )(x2d, packed["wc"], packed["bc"], packed["w1"], packed["b1"],
      packed["w2"], packed["b2"], packed["w3"], packed["b3"])

    # Drop batch padding and the lane-padded action columns outside the kernel.
    return out[:bsz, :n_actions]


# ----------------------------------------------------------------------------
# Parameters (deterministic synthetic init) and one-time packing.
# ----------------------------------------------------------------------------
def init_params(key, n_actions):
    ks = jax.random.split(key, 14)
    p = {}
    p["cn1_w"] = 0.1 * jax.random.normal(ks[0], (6, 6, 3, 3), jnp.float32)
    p["cn1_b"] = 0.1 * jax.random.normal(ks[1], (6,), jnp.float32)
    p["cn2_w"] = 0.1 * jax.random.normal(ks[2], (6, 6, 4, 4), jnp.float32)
    p["cn2_b"] = 0.1 * jax.random.normal(ks[3], (6,), jnp.float32)
    p["cn3_w"] = 0.1 * jax.random.normal(ks[4], (6, 6, 5, 5), jnp.float32)
    p["cn3_b"] = 0.1 * jax.random.normal(ks[5], (6,), jnp.float32)
    p["cn4_w"] = 0.1 * jax.random.normal(ks[6], (1, 6, 1, 1), jnp.float32)
    p["cn4_b"] = 0.1 * jax.random.normal(ks[7], (1,), jnp.float32)
    p["fc1_w"] = 0.05 * jax.random.normal(ks[8], (512, 210), jnp.float32)
    p["fc1_b"] = 0.05 * jax.random.normal(ks[9], (512,), jnp.float32)
    p["fc2_w"] = 0.05 * jax.random.normal(ks[10], (256, 512), jnp.float32)
    p["fc2_b"] = 0.05 * jax.random.normal(ks[11], (256,), jnp.float32)
    p["fc3_w"] = 0.05 * jax.random.normal(ks[12], (n_actions, 256), jnp.float32)
    p["fc3_b"] = 0.05 * jax.random.normal(ks[13], (n_actions,), jnp.float32)
    return p


def pack_params(params):
    """One-time lowering of the PyTorch-layout parameters into the fused-GEMM
    layout.  All four convs (+ PyTorch flatten order + concat) become a single
    (256, 256) Toeplitz-style matrix (rows 0..215 live) + a 256-wide bias; FC
    weights are pre-transposed, fc1 is zero-padded to 256 input rows and fc3 is
    zero-padded to a 128-lane output slab.  Runs once at init, never in the
    forward hot path."""
    h = w = 6
    wc = np.zeros((IN_FEATURES_PAD, CONV_FEATURES_PAD), np.float32)
    bc = np.zeros((CONV_FEATURES_PAD,), np.float32)
    off = 0
    for name in ("cn1", "cn2", "cn3", "cn4"):
        cw = np.asarray(params[name + "_w"], np.float32)   # (Cout, Cin, k, k)
        cb = np.asarray(params[name + "_b"], np.float32)   # (Cout,)
        cout, cin, k, _ = cw.shape
        ho, wo = h - k + 1, w - k + 1
        for co in range(cout):
            for oy in range(ho):
                for ox in range(wo):
                    col = off + (co * ho + oy) * wo + ox
                    bc[col] = cb[co]
                    for ci in range(cin):
                        for ky in range(k):
                            for kx in range(k):
                                row = (ci * h + oy + ky) * w + (ox + kx)
                                wc[row, col] = cw[co, ci, ky, kx]
        off += cout * ho * wo
    assert off == CONV_FEATURES, off

    n_actions = np.asarray(params["fc3_w"]).shape[0]
    out_pad = max(OUT_PAD, _round_up(n_actions, 128))

    w1 = np.zeros((CONV_FEATURES_PAD, HID1), np.float32)
    w1[:CONV_FEATURES, :] = np.asarray(params["fc1_w"], np.float32).T
    w3 = np.zeros((HID2, out_pad), np.float32)
    w3[:, :n_actions] = np.asarray(params["fc3_w"], np.float32).T
    b3 = np.zeros((out_pad,), np.float32)
    b3[:n_actions] = np.asarray(params["fc3_b"], np.float32)

    return {
        "wc": jnp.asarray(wc),
        "bc": jnp.asarray(bc).reshape(1, -1),
        "w1": jnp.asarray(w1),
        "b1": jnp.asarray(params["fc1_b"]).reshape(1, -1),
        "w2": jnp.asarray(np.asarray(params["fc2_w"], np.float32).T),
        "b2": jnp.asarray(params["fc2_b"]).reshape(1, -1),
        "w3": jnp.asarray(w3),
        "b3": jnp.asarray(b3).reshape(1, -1),
    }


# ----------------------------------------------------------------------------
# Pure-JAX reference (independent conv lowering, original param layout).
# ----------------------------------------------------------------------------
def ref_forward(params, x):
    def conv(x, w, b):
        y = jax.lax.conv_general_dilated(
            x, w, window_strides=(1, 1), padding="VALID",
            dimension_numbers=("NCHW", "OIHW", "NCHW"))
        return jax.nn.relu(y + b[None, :, None, None])

    bsz = x.shape[0]
    x1 = conv(x, params["cn1_w"], params["cn1_b"])
    x2 = conv(x, params["cn2_w"], params["cn2_b"])
    x3 = conv(x, params["cn3_w"], params["cn3_b"])
    x4 = conv(x, params["cn4_w"], params["cn4_b"])
    feat = jnp.concatenate(
        [x1.reshape(bsz, -1), x2.reshape(bsz, -1),
         x3.reshape(bsz, -1), x4.reshape(bsz, -1)], axis=1)
    h = jax.nn.relu(feat @ params["fc1_w"].T + params["fc1_b"])
    h = jax.nn.relu(h @ params["fc2_w"].T + params["fc2_b"])
    return h @ params["fc3_w"].T + params["fc3_b"]


if __name__ == "__main__":
    N_ACTIONS = 5
    BATCH = 2

    key = jax.random.PRNGKey(0)
    k_param, k_x = jax.random.split(key)
    params = init_params(k_param, N_ACTIONS)
    packed = pack_params(params)            # once, outside the hot path
    x = jax.random.normal(k_x, (BATCH, 6, 6, 6), jnp.float32)   # NCHW

    fwd = jax.jit(net_forward, static_argnames=("n_actions",))
    out = jax.block_until_ready(fwd(packed, x, n_actions=N_ACTIONS))
    ref = jax.block_until_ready(ref_forward(params, x))

    assert out.shape == (BATCH, N_ACTIONS), out.shape
    assert jnp.allclose(out, ref, atol=2e-3, rtol=2e-3), (out, ref)
    print("KERNEL_OK")
</pallas_src>

<mosaic_0001>
module attributes {stable_mosaic.version = 11 : i64} {
  func.func @_net_fused_kernel(%arg0: i32, %arg1: memref<8x256xf32, #tpu.memory_space<vmem>>, %arg2: memref<256x256xf32, #tpu.memory_space<vmem>>, %arg3: memref<1x256xf32, #tpu.memory_space<vmem>>, %arg4: memref<256x512xf32, #tpu.memory_space<vmem>>, %arg5: memref<1x512xf32, #tpu.memory_space<vmem>>, %arg6: memref<512x256xf32, #tpu.memory_space<vmem>>, %arg7: memref<1x256xf32, #tpu.memory_space<vmem>>, %arg8: memref<256x128xf32, #tpu.memory_space<vmem>>, %arg9: memref<1x128xf32, #tpu.memory_space<vmem>>, %arg10: memref<8x128xf32, #tpu.memory_space<vmem>>) attributes {dimension_semantics = [#tpu.dimension_semantics<parallel>], iteration_bounds = array<i64: 1>, scalar_prefetch = 0 : i64, scratch_operands = 0 : i64, tpu.core_type = #tpu.core_type<tc>, window_params = [{transform_indices = @transform_0, window_bounds = array<i64: 8, 256>}, {pipeline_mode = #tpu.pipeline_mode<synchronous>, transform_indices = @transform_1, window_bounds = array<i64: 256, 256>}, {pipeline_mode = #tpu.pipeline_mode<synchronous>, transform_indices = @transform_2, window_bounds = array<i64: 1, 256>}, {pipeline_mode = #tpu.pipeline_mode<synchronous>, transform_indices = @transform_3, window_bounds = array<i64: 256, 512>}, {pipeline_mode = #tpu.pipeline_mode<synchronous>, transform_indices = @transform_4, window_bounds = array<i64: 1, 512>}, {pipeline_mode = #tpu.pipeline_mode<synchronous>, transform_indices = @transform_5, window_bounds = array<i64: 512, 256>}, {pipeline_mode = #tpu.pipeline_mode<synchronous>, transform_indices = @transform_6, window_bounds = array<i64: 1, 256>}, {pipeline_mode = #tpu.pipeline_mode<synchronous>, transform_indices = @transform_7, window_bounds = array<i64: 256, 128>}, {pipeline_mode = #tpu.pipeline_mode<synchronous>, transform_indices = @transform_8, window_bounds = array<i64: 1, 128>}, {transform_indices = @transform_9, window_bounds = array<i64: 8, 128>}]} {
    %c0 = arith.constant 0 : index
    %c0_0 = arith.constant 0 : index
    %0 = vector.load %arg1[%c0, %c0_0] : memref<8x256xf32, #tpu.memory_space<vmem>>, vector<8x256xf32>
    %c0_1 = arith.constant 0 : index
    %c0_2 = arith.constant 0 : index
    %1 = vector.load %arg2[%c0_1, %c0_2] : memref<256x256xf32, #tpu.memory_space<vmem>>, vector<256x256xf32>
    %cst = arith.constant dense<0.000000e+00> : vector<8x256xf32>
    %2 = tpu.matmul %0, %1, %cst {dimension_numbers = #tpu.dot_dimension_numbers<[1], [0], [0], [1], [0, 0, 1, 1], [], []>} : vector<8x256xf32>, vector<256x256xf32>, vector<8x256xf32> -> vector<8x256xf32>
    %c0_3 = arith.constant 0 : index
    %c0_4 = arith.constant 0 : index
    %3 = vector.load %arg3[%c0_3, %c0_4] : memref<1x256xf32, #tpu.memory_space<vmem>>, vector<1x256xf32>
    %4 = vector.broadcast %3 : vector<1x256xf32> to vector<8x256xf32>
    %5 = arith.addf %2, %4 : vector<8x256xf32>
    %cst_5 = arith.constant 0.000000e+00 : f32
    %6 = vector.broadcast %cst_5 : f32 to vector<8x256xf32>
    %7 = arith.maximumf %5, %6 : vector<8x256xf32>
    %c0_6 = arith.constant 0 : index
    %c0_7 = arith.constant 0 : index
    %8 = vector.load %arg4[%c0_6, %c0_7] : memref<256x512xf32, #tpu.memory_space<vmem>>, vector<256x512xf32>
    %cst_8 = arith.constant dense<0.000000e+00> : vector<8x512xf32>
    %9 = tpu.matmul %7, %8, %cst_8 {dimension_numbers = #tpu.dot_dimension_numbers<[1], [0], [0], [1], [0, 0, 1, 1], [], []>} : vector<8x256xf32>, vector<256x512xf32>, vector<8x512xf32> -> vector<8x512xf32>
    %c0_9 = arith.constant 0 : index
    %c0_10 = arith.constant 0 : index
    %10 = vector.load %arg5[%c0_9, %c0_10] : memref<1x512xf32, #tpu.memory_space<vmem>>, vector<1x512xf32>
    %11 = vector.broadcast %10 : vector<1x512xf32> to vector<8x512xf32>
    %12 = arith.addf %9, %11 : vector<8x512xf32>
    %cst_11 = arith.constant 0.000000e+00 : f32
    %13 = vector.broadcast %cst_11 : f32 to vector<8x512xf32>
    %14 = arith.maximumf %12, %13 : vector<8x512xf32>
    %c0_12 = arith.constant 0 : index
    %c0_13 = arith.constant 0 : index
    %15 = vector.load %arg6[%c0_12, %c0_13] : memref<512x256xf32, #tpu.memory_space<vmem>>, vector<512x256xf32>
    %cst_14 = arith.constant dense<0.000000e+00> : vector<8x256xf32>
    %16 = tpu.matmul %14, %15, %cst_14 {dimension_numbers = #tpu.dot_dimension_numbers<[1], [0], [0], [1], [0, 0, 1, 1], [], []>} : vector<8x512xf32>, vector<512x256xf32>, vector<8x256xf32> -> vector<8x256xf32>
    %c0_15 = arith.constant 0 : index
    %c0_16 = arith.constant 0 : index
    %17 = vector.load %arg7[%c0_15, %c0_16] : memref<1x256xf32, #tpu.memory_space<vmem>>, vector<1x256xf32>
    %18 = vector.broadcast %17 : vector<1x256xf32> to vector<8x256xf32>
    %19 = arith.addf %16, %18 : vector<8x256xf32>
    %cst_17 = arith.constant 0.000000e+00 : f32
    %20 = vector.broadcast %cst_17 : f32 to vector<8x256xf32>
    %21 = arith.maximumf %19, %20 : vector<8x256xf32>
    %c0_18 = arith.constant 0 : index
    %c0_19 = arith.constant 0 : index
    %22 = vector.load %arg8[%c0_18, %c0_19] : memref<256x128xf32, #tpu.memory_space<vmem>>, vector<256x128xf32>
    %cst_20 = arith.constant dense<0.000000e+00> : vector<8x128xf32>
    %23 = tpu.matmul %21, %22, %cst_20 {dimension_numbers = #tpu.dot_dimension_numbers<[1], [0], [0], [1], [0, 0, 1, 1], [], []>} : vector<8x256xf32>, vector<256x128xf32>, vector<8x128xf32> -> vector<8x128xf32>
    %c0_21 = arith.constant 0 : index
    %c0_22 = arith.constant 0 : index
    %24 = vector.load %arg9[%c0_21, %c0_22] : memref<1x128xf32, #tpu.memory_space<vmem>>, vector<1x128xf32>
    %25 = vector.broadcast %24 : vector<1x128xf32> to vector<8x128xf32>
    %26 = arith.addf %23, %25 : vector<8x128xf32>
    %c0_23 = arith.constant 0 : index
    %c0_24 = arith.constant 0 : index
    %27 = vector.load %arg10[%c0_23, %c0_24] : memref<8x128xf32, #tpu.memory_space<vmem>>, vector<8x128xf32>
    tpu.vector_store %arg10[%c0_23, %c0_24], %26 {strides = array<i32>} : memref<8x128xf32, #tpu.memory_space<vmem>>, vector<8x128xf32>,
    return
  }
  func.func @transform_0(%arg0: i32) -> (i32, i32) {
    %c0_i32 = arith.constant 0 : i32
    %c0_i32_0 = arith.constant 0 : i32
    return %arg0, %c0_i32 : i32, i32
  }
  func.func @transform_1(%arg0: i32) -> (i32, i32) {
    %c0_i32 = arith.constant 0 : i32
    %c0_i32_0 = arith.constant 0 : i32
    %c0_i32_1 = arith.constant 0 : i32
    return %c0_i32, %c0_i32_0 : i32, i32
  }
  func.func @transform_2(%arg0: i32) -> (i32, i32) {
    %c0_i32 = arith.constant 0 : i32
    %c0_i32_0 = arith.constant 0 : i32
    %c0_i32_1 = arith.constant 0 : i32
    return %c0_i32, %c0_i32_0 : i32, i32
  }
  func.func @transform_3(%arg0: i32) -> (i32, i32) {
    %c0_i32 = arith.constant 0 : i32
    %c0_i32_0 = arith.constant 0 : i32
    %c0_i32_1 = arith.constant 0 : i32
    return %c0_i32, %c0_i32_0 : i32, i32
  }
  func.func @transform_4(%arg0: i32) -> (i32, i32) {
    %c0_i32 = arith.constant 0 : i32
    %c0_i32_0 = arith.constant 0 : i32
    %c0_i32_1 = arith.constant 0 : i32
    return %c0_i32, %c0_i32_0 : i32, i32
  }
  func.func @transform_5(%arg0: i32) -> (i32, i32) {
    %c0_i32 = arith.constant 0 : i32
    %c0_i32_0 = arith.constant 0 : i32
    %c0_i32_1 = arith.constant 0 : i32
    return %c0_i32, %c0_i32_0 : i32, i32
  }
  func.func @transform_6(%arg0: i32) -> (i32, i32) {
    %c0_i32 = arith.constant 0 : i32
    %c0_i32_0 = arith.constant 0 : i32
    %c0_i32_1 = arith.constant 0 : i32
    return %c0_i32, %c0_i32_0 : i32, i32
  }
  func.func @transform_7(%arg0: i32) -> (i32, i32) {
    %c0_i32 = arith.constant 0 : i32
    %c0_i32_0 = arith.constant 0 : i32
    %c0_i32_1 = arith.constant 0 : i32
    return %c0_i32, %c0_i32_0 : i32, i32
  }
  func.func @transform_8(%arg0: i32) -> (i32, i32) {
    %c0_i32 = arith.constant 0 : i32
    %c0_i32_0 = arith.constant 0 : i32
    %c0_i32_1 = arith.constant 0 : i32
    return %c0_i32, %c0_i32_0 : i32, i32
  }
  func.func @transform_9(%arg0: i32) -> (i32, i32) {
    %c0_i32 = arith.constant 0 : i32
    %c0_i32_0 = arith.constant 0 : i32
    return %arg0, %c0_i32 : i32, i32
  }
}

</mosaic_0001>

<llo_original>
// kernel: net_forward.1
$region0: #{net_forward.1}
  #allocation0 [shape = 'u32[]', space=smem, size = 0x4, offset = 0x4, fixed_abs, tag = 'smem constant byte address 0x4 - core index']
  #allocation1 [shape = 'u32[144,128]{1,0:T(1,128)}', space=vmem, size = 0x12000, scoped, tag = 'internal scratch']
  %s0 = inlined_call_operand.vmem [shape: f32[8,256], index: 0, kind: input, shape index: {}]
  %s1 = inlined_call_operand.hbm [shape: f32[256,256], index: 1, kind: input, shape index: {}]
  %s2 = inlined_call_operand.vmem [shape: f32[1,256], index: 2, kind: input, shape index: {}]
  %s3 = inlined_call_operand.hbm [shape: f32[256,512], index: 3, kind: input, shape index: {}]
  %s4 = inlined_call_operand.vmem [shape: f32[1,512], index: 4, kind: input, shape index: {}]
  %s5 = inlined_call_operand.hbm [shape: f32[512,256], index: 5, kind: input, shape index: {}]
  %s6 = inlined_call_operand.vmem [shape: f32[1,256], index: 6, kind: input, shape index: {}]
  %s7 = inlined_call_operand.vmem [shape: f32[256,128], index: 7, kind: input, shape index: {}]
  %s8 = inlined_call_operand.vmem [shape: f32[1,128], index: 8, kind: input, shape index: {}]
  %s9 = inlined_call_operand.vmem [shape: f32[8,128], index: 9, kind: output, shape index: {}]
  %s10 = sld [smem:[#allocation0]]
  $region58: #{net_forward.1} parent=0
    _
  %s12 = ssub.s32 1, %s10
  %s13 = scalar_select 0, %s12, %s10
  $region1: #{net_forward.1} parent=0
    #allocation2 [shape = 'u8[262144]{0}', space=vmem, size = 0x40000, scoped, tag = 'input window, operand 1, single buffered']
    #allocation3 [shape = 's32[1]{0}', space=sflag, size = 0x4, scoped, tag = 'scoped memory for net_forward.1']
    #allocation4 [shape = 'u8[524288]{0}', space=vmem, size = 0x80000, scoped, tag = 'input window, operand 3, single buffered']
    #allocation5 [shape = 's32[1]{0}', space=sflag, size = 0x4, scoped, tag = 'scoped memory for net_forward.1']
    #allocation6 [shape = 'u8[524288]{0}', space=vmem, size = 0x80000, scoped, tag = 'input window, operand 5, single buffered']
    %14 = vsyncpa [#allocation3], 0
    %15 = vsyncpa [#allocation5], 0
    // Predicated region
    $region2: #{net_forward.1} parent=1 // pred_check
      _
    $region3: #{net_forward.1} parent=1 // pred_check_branch
      %17 = sbr.rel (0) target = $region5
    $region4: #{net_forward.1} parent=1 // pred_region
      _
    $region5: #{net_forward.1} parent=1 // pred_fallthru
      _
    // Predicated region
    $region6: #{net_forward.1} parent=1 // pred_check
      _
    $region7: #{net_forward.1} parent=1 // pred_check_branch
      %19 = sbr.rel (0) target = $region9
    $region8: #{net_forward.1} parent=1 // pred_region
      %s21 = ssub.s32 8192, 8192
      %22 = vsyncadd [#allocation3], %s21
      %s23 = sshll.u32 [#allocation2], 4
      %s24 = int_to_ptr.vmem [resolvable:$true] %s23
      %29 = dma.hbm_to_vmem [thread:$0]  %s1, 8192, %s24, [#allocation3], 256, 256, 16
    $region9: #{net_forward.1} parent=1 // pred_fallthru
      _
    // Predicated region
    $region10: #{net_forward.1} parent=1 // pred_check
      _
    $region11: #{net_forward.1} parent=1 // pred_check_branch
      %31 = sbr.rel (0) target = $region13
    $region12: #{net_forward.1} parent=1 // pred_region
      _
    $region13: #{net_forward.1} parent=1 // pred_fallthru
      _
    // Predicated region
    $region14: #{net_forward.1} parent=1 // pred_check
      _
    $region15: #{net_forward.1} parent=1 // pred_check_branch
      %33 = sbr.rel (0) target = $region17
    $region16: #{net_forward.1} parent=1 // pred_region
      %s35 = ssub.s32 16384, 16384
      %36 = vsyncadd [#allocation5], %s35
      %s37 = sshll.u32 [#allocation4], 4
      %s38 = int_to_ptr.vmem [resolvable:$true] %s37
      %43 = dma.hbm_to_vmem [thread:$0]  %s3, 16384, %s38, [#allocation5], 512, 512, 32
    $region17: #{net_forward.1} parent=1 // pred_fallthru
      _
    // Predicated region
    $region18: #{net_forward.1} parent=1 // pred_check
      _
    $region19: #{net_forward.1} parent=1 // pred_check_branch
      %45 = sbr.rel (0) target = $region21
    $region20: #{net_forward.1} parent=1 // pred_region
      _
    $region21: #{net_forward.1} parent=1 // pred_fallthru
      _
    // Predicated region
    $region22: #{net_forward.1} parent=1 // pred_check
      _
    $region23: #{net_forward.1} parent=1 // pred_check_branch
      %47 = sbr.rel (0) target = $region25
    $region24: #{net_forward.1} parent=1 // pred_region
      %s49 = ssub.s32 16384, 16384
      %50 = vsyncadd [#allocation5], %s49
      %s51 = sshll.u32 [#allocation6], 4
      %s52 = int_to_ptr.vmem [resolvable:$true] %s51
      %57 = dma.hbm_to_vmem [thread:$0]  %s5, 16384, %s52, [#allocation5], 256, 256, 16
    $region25: #{net_forward.1} parent=1 // pred_fallthru
      _
    // Predicated region
    $region26: #{net_forward.1} parent=1 // pred_check
      _
    $region27: #{net_forward.1} parent=1 // pred_check_branch
      %59 = sbr.rel (0) target = $region29
    $region28: #{net_forward.1} parent=1 // pred_region
      _
    $region29: #{net_forward.1} parent=1 // pred_fallthru
      _
    // Predicated region
    $region30: #{net_forward.1} parent=1 // pred_check
      _
    $region31: #{net_forward.1} parent=1 // pred_check_branch
      %61 = sbr.rel (0) target = $region33
    $region32: #{net_forward.1} parent=1 // pred_region
      _
    $region33: #{net_forward.1} parent=1 // pred_fallthru
      _
    // Predicated region
    $region34: #{net_forward.1} parent=1 // pred_check
      _
    $region35: #{net_forward.1} parent=1 // pred_check_branch
      %63 = sbr.rel (0) target = $region37
    $region36: #{net_forward.1} parent=1 // pred_region
      _
    $region37: #{net_forward.1} parent=1 // pred_fallthru
      _
    // Predicated region
    $region38: #{net_forward.1} parent=1 // pred_check
      _
    $region39: #{net_forward.1} parent=1 // pred_check_branch
      %65 = sbr.rel (0) target = $region41
    $region40: #{net_forward.1} parent=1 // pred_region
      %66 = dma.done [#allocation3], 8192
    $region41: #{net_forward.1} parent=1 // pred_fallthru
      _
    // Predicated region
    $region42: #{net_forward.1} parent=1 // pred_check
      _
    $region43: #{net_forward.1} parent=1 // pred_check_branch
      %68 = sbr.rel (0) target = $region45
    $region44: #{net_forward.1} parent=1 // pred_region
      %69 = dma.done [#allocation5], 16384
    $region45: #{net_forward.1} parent=1 // pred_fallthru
      _
    // Predicated region
    $region46: #{net_forward.1} parent=1 // pred_check
      _
    $region47: #{net_forward.1} parent=1 // pred_check_branch
      %71 = sbr.rel (0) target = $region49
    $region48: #{net_forward.1} parent=1 // pred_region
      %72 = dma.done [#allocation5], 16384
    $region49: #{net_forward.1} parent=1 // pred_fallthru
      _
    %v73 = vld [vmem:[%s0] sm:$0xff]
    %v74 = vld [vmem:[%s0 + $0x8] sm:$0xff]
    %v75 = vld [vmem:[#allocation2] sm:$0xff]
    %v76 = vld [vmem:[#allocation2 + $0x8] sm:$0xff]
    %v77 = vld [vmem:[#allocation2 + $0x10] sm:$0xff]
    %v78 = vld [vmem:[#allocation2 + $0x18] sm:$0xff]
    %v79 = vld [vmem:[#allocation2 + $0x20] sm:$0xff]
    %v80 = vld [vmem:[#allocation2 + $0x28] sm:$0xff]
    %v81 = vld [vmem:[#allocation2 + $0x30] sm:$0xff]
    %v82 = vld [vmem:[#allocation2 + $0x38] sm:$0xff]
    %v83 = vld [vmem:[#allocation2 + $0x40] sm:$0xff]
    %v84 = vld [vmem:[#allocation2 + $0x48] sm:$0xff]
    %v85 = vld [vmem:[#allocation2 + $0x50] sm:$0xff]
    %v86 = vld [vmem:[#allocation2 + $0x58] sm:$0xff]
    %v87 = vld [vmem:[#allocation2 + $0x60] sm:$0xff]
    %v88 = vld [vmem:[#allocation2 + $0x68] sm:$0xff]
    %v89 = vld [vmem:[#allocation2 + $0x70] sm:$0xff]
    %v90 = vld [vmem:[#allocation2 + $0x78] sm:$0xff]
    %v91 = vld [vmem:[#allocation2 + $0x80] sm:$0xff]
    %v92 = vld [vmem:[#allocation2 + $0x88] sm:$0xff]
    %v93 = vld [vmem:[#allocation2 + $0x90] sm:$0xff]
    %v94 = vld [vmem:[#allocation2 + $0x98] sm:$0xff]
    %v95 = vld [vmem:[#allocation2 + $0xa0] sm:$0xff]
    %v96 = vld [vmem:[#allocation2 + $0xa8] sm:$0xff]
    %v97 = vld [vmem:[#allocation2 + $0xb0] sm:$0xff]
    %v98 = vld [vmem:[#allocation2 + $0xb8] sm:$0xff]
    %v99 = vld [vmem:[#allocation2 + $0xc0] sm:$0xff]
    %v100 = vld [vmem:[#allocation2 + $0xc8] sm:$0xff]
    %v101 = vld [vmem:[#allocation2 + $0xd0] sm:$0xff]
    %v102 = vld [vmem:[#allocation2 + $0xd8] sm:$0xff]
    %v103 = vld [vmem:[#allocation2 + $0xe0] sm:$0xff]
    %v104 = vld [vmem:[#allocation2 + $0xe8] sm:$0xff]
    %v105 = vld [vmem:[#allocation2 + $0xf0] sm:$0xff]
    %v106 = vld [vmem:[#allocation2 + $0xf8] sm:$0xff]
    %v107 = vld [vmem:[#allocation2 + $0x100] sm:$0xff]
    %v108 = vld [vmem:[#allocation2 + $0x108] sm:$0xff]
    %v109 = vld [vmem:[#allocation2 + $0x110] sm:$0xff]
    %v110 = vld [vmem:[#allocation2 + $0x118] sm:$0xff]
    %v111 = vld [vmem:[#allocation2 + $0x120] sm:$0xff]
    %v112 = vld [vmem:[#allocation2 + $0x128] sm:$0xff]
    %v113 = vld [vmem:[#allocation2 + $0x130] sm:$0xff]
    %v114 = vld [vmem:[#allocation2 + $0x138] sm:$0xff]
    %v115 = vld [vmem:[#allocation2 + $0x140] sm:$0xff]
    %v116 = vld [vmem:[#allocation2 + $0x148] sm:$0xff]
    %v117 = vld [vmem:[#allocation2 + $0x150] sm:$0xff]
    %v118 = vld [vmem:[#allocation2 + $0x158] sm:$0xff]
    %v119 = vld [vmem:[#allocation2 + $0x160] sm:$0xff]
    %v120 = vld [vmem:[#allocation2 + $0x168] sm:$0xff]
    %v121 = vld [vmem:[#allocation2 + $0x170] sm:$0xff]
    %v122 = vld [vmem:[#allocation2 + $0x178] sm:$0xff]
    %v123 = vld [vmem:[#allocation2 + $0x180] sm:$0xff]
    %v124 = vld [vmem:[#allocation2 + $0x188] sm:$0xff]
    %v125 = vld [vmem:[#allocation2 + $0x190] sm:$0xff]
    %v126 = vld [vmem:[#allocation2 + $0x198] sm:$0xff]
    %v127 = vld [vmem:[#allocation2 + $0x1a0] sm:$0xff]
    %v128 = vld [vmem:[#allocation2 + $0x1a8] sm:$0xff]
    %v129 = vld [vmem:[#allocation2 + $0x1b0] sm:$0xff]
    %v130 = vld [vmem:[#allocation2 + $0x1b8] sm:$0xff]
    %v131 = vld [vmem:[#allocation2 + $0x1c0] sm:$0xff]
    %v132 = vld [vmem:[#allocation2 + $0x1c8] sm:$0xff]
    %v133 = vld [vmem:[#allocation2 + $0x1d0] sm:$0xff]
    %v134 = vld [vmem:[#allocation2 + $0x1d8] sm:$0xff]
    %v135 = vld [vmem:[#allocation2 + $0x1e0] sm:$0xff]
    %v136 = vld [vmem:[#allocation2 + $0x1e8] sm:$0xff]
    %v137 = vld [vmem:[#allocation2 + $0x1f0] sm:$0xff]
    %v138 = vld [vmem:[#allocation2 + $0x1f8] sm:$0xff]
    %v139 = vld [vmem:[%s2] sm:$0x3]
    %v141 = vlaneseq
    %v142 = vshrl.u32 %v141, 7
    %v143 = vsub.s32 0, %v142
    %v144 = vrot.slane %v139, %v143
    %v145 = vlaneseq
    %v146 = vshrl.u32 %v145, 7
    %v147 = vsub.s32 1, %v146
    %v148 = vrot.slane %v139, %v147
    %151 = vmatprep.subr.mxu0 %v76
    %152 = vmatpush1.msra.mxu0 %v75
    %153 = vmatprep.subr.mxu0 %v78
    %154 = vmatpush1.msra.mxu0 %v77
    %155 = vmatprep.subr.mxu0 %v80
    %156 = vmatpush1.msra.mxu0 %v79
    %157 = vmatprep.subr.mxu0 %v82
    %158 = vmatpush1.msra.mxu0 %v81
    %159 = vmatprep.subr.mxu0 %v84
    %160 = vmatpush1.msra.mxu0 %v83
    %161 = vmatprep.subr.mxu0 %v86
    %162 = vmatpush1.msra.mxu0 %v85
    %163 = vmatprep.subr.mxu0 %v88
    %164 = vmatpush1.msra.mxu0 %v87
    %165 = vmatprep.subr.mxu0 %v90
    %166 = vmatpush1.msra.mxu0 %v89
    %167 = vmatprep.subr.mxu0 %v92
    %168 = vmatpush1.msra.mxu0 %v91
    %169 = vmatprep.subr.mxu0 %v94
    %170 = vmatpush1.msra.mxu0 %v93
    %171 = vmatprep.subr.mxu0 %v96
    %172 = vmatpush1.msra.mxu0 %v95
    %173 = vmatprep.subr.mxu0 %v98
    %174 = vmatpush1.msra.mxu0 %v97
    %175 = vmatprep.subr.mxu0 %v100
    %176 = vmatpush1.msra.mxu0 %v99
    %177 = vmatprep.subr.mxu0 %v102
    %178 = vmatpush1.msra.mxu0 %v101
    %179 = vmatprep.subr.mxu0 %v104
    %180 = vmatpush1.msra.mxu0 %v103
    %181 = vmatprep.subr.mxu0 %v106
    %182 = vmatpush1.msra.mxu0 %v105
    %183 = vmatprep.subr.mxu0 %v108
    %184 = vmatpush1.msra.mxu0 %v107
    %185 = vmatprep.subr.mxu0 %v110
    %186 = vmatpush1.msra.mxu0 %v109
    %187 = vmatprep.subr.mxu0 %v112
    %188 = vmatpush1.msra.mxu0 %v111
    %189 = vmatprep.subr.mxu0 %v114
    %190 = vmatpush1.msra.mxu0 %v113
    %191 = vmatprep.subr.mxu0 %v116
    %192 = vmatpush1.msra.mxu0 %v115
    %193 = vmatprep.subr.mxu0 %v118
    %194 = vmatpush1.msra.mxu0 %v117
    %195 = vmatprep.subr.mxu0 %v120
    %196 = vmatpush1.msra.mxu0 %v119
    %197 = vmatprep.subr.mxu0 %v122
    %198 = vmatpush1.msra.mxu0 %v121
    %199 = vmatprep.subr.mxu0 %v124
    %200 = vmatpush1.msra.mxu0 %v123
    %201 = vmatprep.subr.mxu0 %v126
    %202 = vmatpush1.msra.mxu0 %v125
    %203 = vmatprep.subr.mxu0 %v128
    %204 = vmatpush1.msra.mxu0 %v127
    %205 = vmatprep.subr.mxu0 %v130
    %206 = vmatpush1.msra.mxu0 %v129
    %207 = vmatprep.subr.mxu0 %v132
    %208 = vmatpush1.msra.mxu0 %v131
    %209 = vmatprep.subr.mxu0 %v134
    %210 = vmatpush1.msra.mxu0 %v133
    %211 = vmatprep.subr.mxu0 %v136
    %212 = vmatpush1.msra.mxu0 %v135
    %213 = vmatprep.subr.mxu0 %v138
    %214 = vmatpush1.msra.mxu0 %v137
    %215 = vmatprep.mubr.f32.mxu0 %v74
    %216 = vmatmul.mubr.f32.gmra.mrb[0].mxu0 %v73
    %v217 = vpop.f32.mrb[0].mxu0
    %v218 = vadd.f32 %v144, %v217
    %v219 = vpop.f32.mrb[0].mxu0
    %v220 = vadd.f32 %v148, %v219
    %221 = vdwg.mxu0
    %v222 = vmax.f32 %v218, 0.0
    %v223 = vmax.f32 %v220, 0.0
    %v224 = vld [vmem:[#allocation4] sm:$0xff]
    %v225 = vld [vmem:[#allocation4 + $0x8] sm:$0xff]
    %v226 = vld [vmem:[#allocation4 + $0x10] sm:$0xff]
    %v227 = vld [vmem:[#allocation4 + $0x18] sm:$0xff]
    %v228 = vld [vmem:[#allocation4 + $0x20] sm:$0xff]
    %v229 = vld [vmem:[#allocation4 + $0x28] sm:$0xff]
    %v230 = vld [vmem:[#allocation4 + $0x30] sm:$0xff]
    %v231 = vld [vmem:[#allocation4 + $0x38] sm:$0xff]
    %v232 = vld [vmem:[#allocation4 + $0x40] sm:$0xff]
    %v233 = vld [vmem:[#allocation4 + $0x48] sm:$0xff]
    %v234 = vld [vmem:[#allocation4 + $0x50] sm:$0xff]
    %v235 = vld [vmem:[#allocation4 + $0x58] sm:$0xff]
    %v236 = vld [vmem:[#allocation4 + $0x60] sm:$0xff]
    %v237 = vld [vmem:[#allocation4 + $0x68] sm:$0xff]
    %v238 = vld [vmem:[#allocation4 + $0x70] sm:$0xff]
    %v239 = vld [vmem:[#allocation4 + $0x78] sm:$0xff]
    %v240 = vld [vmem:[#allocation4 + $0x80] sm:$0xff]
    %v241 = vld [vmem:[#allocation4 + $0x88] sm:$0xff]
    %v242 = vld [vmem:[#allocation4 + $0x90] sm:$0xff]
    %v243 = vld [vmem:[#allocation4 + $0x98] sm:$0xff]
    %v244 = vld [vmem:[#allocation4 + $0xa0] sm:$0xff]
    %v245 = vld [vmem:[#allocation4 + $0xa8] sm:$0xff]
    %v246 = vld [vmem:[#allocation4 + $0xb0] sm:$0xff]
    %v247 = vld [vmem:[#allocation4 + $0xb8] sm:$0xff]
    %v248 = vld [vmem:[#allocation4 + $0xc0] sm:$0xff]
    %v249 = vld [vmem:[#allocation4 + $0xc8] sm:$0xff]
    %v250 = vld [vmem:[#allocation4 + $0xd0] sm:$0xff]
    %v251 = vld [vmem:[#allocation4 + $0xd8] sm:$0xff]
    %v252 = vld [vmem:[#allocation4 + $0xe0] sm:$0xff]
    %v253 = vld [vmem:[#allocation4 + $0xe8] sm:$0xff]
    %v254 = vld [vmem:[#allocation4 + $0xf0] sm:$0xff]
    %v255 = vld [vmem:[#allocation4 + $0xf8] sm:$0xff]
    %v256 = vld [vmem:[#allocation4 + $0x100] sm:$0xff]
    %v257 = vld [vmem:[#allocation4 + $0x108] sm:$0xff]
    %v258 = vld [vmem:[#allocation4 + $0x110] sm:$0xff]
    %v259 = vld [vmem:[#allocation4 + $0x118] sm:$0xff]
    %v260 = vld [vmem:[#allocation4 + $0x120] sm:$0xff]
    %v261 = vld [vmem:[#allocation4 + $0x128] sm:$0xff]
    %v262 = vld [vmem:[#allocation4 + $0x130] sm:$0xff]
    %v263 = vld [vmem:[#allocation4 + $0x138] sm:$0xff]
    %v264 = vld [vmem:[#allocation4 + $0x140] sm:$0xff]
    %v265 = vld [vmem:[#allocation4 + $0x148] sm:$0xff]
    %v266 = vld [vmem:[#allocation4 + $0x150] sm:$0xff]
    %v267 = vld [vmem:[#allocation4 + $0x158] sm:$0xff]
    %v268 = vld [vmem:[#allocation4 + $0x160] sm:$0xff]
    %v269 = vld [vmem:[#allocation4 + $0x168] sm:$0xff]
    %v270 = vld [vmem:[#allocation4 + $0x170] sm:$0xff]
    %v271 = vld [vmem:[#allocation4 + $0x178] sm:$0xff]
    %v272 = vld [vmem:[#allocation4 + $0x180] sm:$0xff]
    %v273 = vld [vmem:[#allocation4 + $0x188] sm:$0xff]
    %v274 = vld [vmem:[#allocation4 + $0x190] sm:$0xff]
    %v275 = vld [vmem:[#allocation4 + $0x198] sm:$0xff]
    %v276 = vld [vmem:[#allocation4 + $0x1a0] sm:$0xff]
    %v277 = vld [vmem:[#allocation4 + $0x1a8] sm:$0xff]
    %v278 = vld [vmem:[#allocation4 + $0x1b0] sm:$0xff]
    %v279 = vld [vmem:[#allocation4 + $0x1b8] sm:$0xff]
    %v280 = vld [vmem:[#allocation4 + $0x1c0] sm:$0xff]
    %v281 = vld [vmem:[#allocation4 + $0x1c8] sm:$0xff]
    %v282 = vld [vmem:[#allocation4 + $0x1d0] sm:$0xff]
    %v283 = vld [vmem:[#allocation4 + $0x1d8] sm:$0xff]
    %v284 = vld [vmem:[#allocation4 + $0x1e0] sm:$0xff]
    %v285 = vld [vmem:[#allocation4 + $0x1e8] sm:$0xff]
    %v286 = vld [vmem:[#allocation4 + $0x1f0] sm:$0xff]
    %v287 = vld [vmem:[#allocation4 + $0x1f8] sm:$0xff]
    %v288 = vld [vmem:[#allocation4 + $0x200] sm:$0xff]
    %v289 = vld [vmem:[#allocation4 + $0x208] sm:$0xff]
    %v290 = vld [vmem:[#allocation4 + $0x210] sm:$0xff]
    %v291 = vld [vmem:[#allocation4 + $0x218] sm:$0xff]
    %v292 = vld [vmem:[#allocation4 + $0x220] sm:$0xff]
    %v293 = vld [vmem:[#allocation4 + $0x228] sm:$0xff]
    %v294 = vld [vmem:[#allocation4 + $0x230] sm:$0xff]
    %v295 = vld [vmem:[#allocation4 + $0x238] sm:$0xff]
    %v296 = vld [vmem:[#allocation4 + $0x240] sm:$0xff]
    %v297 = vld [vmem:[#allocation4 + $0x248] sm:$0xff]
    %v298 = vld [vmem:[#allocation4 + $0x250] sm:$0xff]
    %v299 = vld [vmem:[#allocation4 + $0x258] sm:$0xff]
    %v300 = vld [vmem:[#allocation4 + $0x260] sm:$0xff]
    %v301 = vld [vmem:[#allocation4 + $0x268] sm:$0xff]
    %v302 = vld [vmem:[#allocation4 + $0x270] sm:$0xff]
    %v303 = vld [vmem:[#allocation4 + $0x278] sm:$0xff]
    %v304 = vld [vmem:[#allocation4 + $0x280] sm:$0xff]
    %v305 = vld [vmem:[#allocation4 + $0x288] sm:$0xff]
    %v306 = vld [vmem:[#allocation4 + $0x290] sm:$0xff]
    %v307 = vld [vmem:[#allocation4 + $0x298] sm:$0xff]
    %v308 = vld [vmem:[#allocation4 + $0x2a0] sm:$0xff]
    %v309 = vld [vmem:[#allocation4 + $0x2a8] sm:$0xff]
    %v310 = vld [vmem:[#allocation4 + $0x2b0] sm:$0xff]
    %v311 = vld [vmem:[#allocation4 + $0x2b8] sm:$0xff]
    %v312 = vld [vmem:[#allocation4 + $0x2c0] sm:$0xff]
    %v313 = vld [vmem:[#allocation4 + $0x2c8] sm:$0xff]
    %v314 = vld [vmem:[#allocation4 + $0x2d0] sm:$0xff]
    %v315 = vld [vmem:[#allocation4 + $0x2d8] sm:$0xff]
    %v316 = vld [vmem:[#allocation4 + $0x2e0] sm:$0xff]
    %v317 = vld [vmem:[#allocation4 + $0x2e8] sm:$0xff]
    %v318 = vld [vmem:[#allocation4 + $0x2f0] sm:$0xff]
    %v319 = vld [vmem:[#allocation4 + $0x2f8] sm:$0xff]
    %v320 = vld [vmem:[#allocation4 + $0x300] sm:$0xff]
    %v321 = vld [vmem:[#allocation4 + $0x308] sm:$0xff]
    %v322 = vld [vmem:[#allocation4 + $0x310] sm:$0xff]
    %v323 = vld [vmem:[#allocation4 + $0x318] sm:$0xff]
    %v324 = vld [vmem:[#allocation4 + $0x320] sm:$0xff]
    %v325 = vld [vmem:[#allocation4 + $0x328] sm:$0xff]
    %v326 = vld [vmem:[#allocation4 + $0x330] sm:$0xff]
    %v327 = vld [vmem:[#allocation4 + $0x338] sm:$0xff]
    %v328 = vld [vmem:[#allocation4 + $0x340] sm:$0xff]
    %v329 = vld [vmem:[#allocation4 + $0x348] sm:$0xff]
    %v330 = vld [vmem:[#allocation4 + $0x350] sm:$0xff]
    %v331 = vld [vmem:[#allocation4 + $0x358] sm:$0xff]
    %v332 = vld [vmem:[#allocation4 + $0x360] sm:$0xff]
    %v333 = vld [vmem:[#allocation4 + $0x368] sm:$0xff]
    %v334 = vld [vmem:[#allocation4 + $0x370] sm:$0xff]
    %v335 = vld [vmem:[#allocation4 + $0x378] sm:$0xff]
    %v336 = vld [vmem:[#allocation4 + $0x380] sm:$0xff]
    %v337 = vld [vmem:[#allocation4 + $0x388] sm:$0xff]
    %v338 = vld [vmem:[#allocation4 + $0x390] sm:$0xff]
    %v339 = vld [vmem:[#allocation4 + $0x398] sm:$0xff]
    %v340 = vld [vmem:[#allocation4 + $0x3a0] sm:$0xff]
    %v341 = vld [vmem:[#allocation4 + $0x3a8] sm:$0xff]
    %v342 = vld [vmem:[#allocation4 + $0x3b0] sm:$0xff]
    %v343 = vld [vmem:[#allocation4 + $0x3b8] sm:$0xff]
    %v344 = vld [vmem:[#allocation4 + $0x3c0] sm:$0xff]
    %v345 = vld [vmem:[#allocation4 + $0x3c8] sm:$0xff]
    %v346 = vld [vmem:[#allocation4 + $0x3d0] sm:$0xff]
    %v347 = vld [vmem:[#allocation4 + $0x3d8] sm:$0xff]
    %v348 = vld [vmem:[#allocation4 + $0x3e0] sm:$0xff]
    %v349 = vld [vmem:[#allocation4 + $0x3e8] sm:$0xff]
    %v350 = vld [vmem:[#allocation4 + $0x3f0] sm:$0xff]
    %v351 = vld [vmem:[#allocation4 + $0x3f8] sm:$0xff]
    %v352 = vld [vmem:[%s4] sm:$0xf]
    %v354 = vlaneseq
    %v355 = vshrl.u32 %v354, 7
    %v356 = vsub.s32 0, %v355
    %v357 = vrot.slane %v352, %v356
    %v358 = vlaneseq
    %v359 = vshrl.u32 %v358, 7
    %v360 = vsub.s32 1, %v359
    %v361 = vrot.slane %v352, %v360
    %v362 = vlaneseq
    %v363 = vshrl.u32 %v362, 7
    %v364 = vsub.s32 2, %v363
    %v365 = vrot.slane %v352, %v364
    %v366 = vlaneseq
    %v367 = vshrl.u32 %v366, 7
    %v368 = vsub.s32 3, %v367
    %v369 = vrot.slane %v352, %v368
    %374 = vmatprep.subr.mxu0 %v225
    %375 = vmatpush1.msra.mxu0 %v224
    %376 = vmatprep.subr.mxu0 %v229
    %377 = vmatpush1.msra.mxu0 %v228
    %378 = vmatprep.subr.mxu0 %v233
    %379 = vmatpush1.msra.mxu0 %v232
    %380 = vmatprep.subr.mxu0 %v237
    %381 = vmatpush1.msra.mxu0 %v236
    %382 = vmatprep.subr.mxu0 %v241
    %383 = vmatpush1.msra.mxu0 %v240
    %384 = vmatprep.subr.mxu0 %v245
    %385 = vmatpush1.msra.mxu0 %v244
    %386 = vmatprep.subr.mxu0 %v249
    %387 = vmatpush1.msra.mxu0 %v248
    %388 = vmatprep.subr.mxu0 %v253
    %389 = vmatpush1.msra.mxu0 %v252
    %390 = vmatprep.subr.mxu0 %v257
    %391 = vmatpush1.msra.mxu0 %v256
    %392 = vmatprep.subr.mxu0 %v261
    %393 = vmatpush1.msra.mxu0 %v260
    %394 = vmatprep.subr.mxu0 %v265
    %395 = vmatpush1.msra.mxu0 %v264
    %396 = vmatprep.subr.mxu0 %v269
    %397 = vmatpush1.msra.mxu0 %v268
    %398 = vmatprep.subr.mxu0 %v273
    %399 = vmatpush1.msra.mxu0 %v272
    %400 = vmatprep.subr.mxu0 %v277
    %401 = vmatpush1.msra.mxu0 %v276
    %402 = vmatprep.subr.mxu0 %v281
    %403 = vmatpush1.msra.mxu0 %v280
    %404 = vmatprep.subr.mxu0 %v285
    %405 = vmatpush1.msra.mxu0 %v284
    %406 = vmatprep.subr.mxu0 %v289
    %407 = vmatpush1.msra.mxu0 %v288
    %408 = vmatprep.subr.mxu0 %v293
    %409 = vmatpush1.msra.mxu0 %v292
    %410 = vmatprep.subr.mxu0 %v297
    %411 = vmatpush1.msra.mxu0 %v296
    %412 = vmatprep.subr.mxu0 %v301
    %413 = vmatpush1.msra.mxu0 %v300
    %414 = vmatprep.subr.mxu0 %v305
    %415 = vmatpush1.msra.mxu0 %v304
    %416 = vmatprep.subr.mxu0 %v309
    %417 = vmatpush1.msra.mxu0 %v308
    %418 = vmatprep.subr.mxu0 %v313
    %419 = vmatpush1.msra.mxu0 %v312
    %420 = vmatprep.subr.mxu0 %v317
    %421 = vmatpush1.msra.mxu0 %v316
    %422 = vmatprep.subr.mxu0 %v321
    %423 = vmatpush1.msra.mxu0 %v320
    %424 = vmatprep.subr.mxu0 %v325
    %425 = vmatpush1.msra.mxu0 %v324
    %426 = vmatprep.subr.mxu0 %v329
    %427 = vmatpush1.msra.mxu0 %v328
    %428 = vmatprep.subr.mxu0 %v333
    %429 = vmatpush1.msra.mxu0 %v332
    %430 = vmatprep.subr.mxu0 %v337
    %431 = vmatpush1.msra.mxu0 %v336
    %432 = vmatprep.subr.mxu0 %v341
    %433 = vmatpush1.msra.mxu0 %v340
    %434 = vmatprep.subr.mxu0 %v345
    %435 = vmatpush1.msra.mxu0 %v344
    %436 = vmatprep.subr.mxu0 %v349
    %437 = vmatpush1.msra.mxu0 %v348
    %438 = vmatprep.mubr.f32.mxu0 %v223
    %439 = vmatmul.mubr.f32.gmra.mrb[0].mxu0 %v222
    %v440 = vpop.f32.mrb[0].mxu0
    %v441 = vadd.f32 %v357, %v440
    %v442 = vpop.f32.mrb[0].mxu0
    %v443 = vadd.f32 %v361, %v442
    %444 = vdwg.mxu0
    %445 = vmatprep.subr.mxu0 %v227
    %446 = vmatpush1.msra.mxu0 %v226
    %447 = vmatprep.subr.mxu0 %v231
    %448 = vmatpush1.msra.mxu0 %v230
    %449 = vmatprep.subr.mxu0 %v235
    %450 = vmatpush1.msra.mxu0 %v234
    %451 = vmatprep.subr.mxu0 %v239
    %452 = vmatpush1.msra.mxu0 %v238
    %453 = vmatprep.subr.mxu0 %v243
    %454 = vmatpush1.msra.mxu0 %v242
    %455 = vmatprep.subr.mxu0 %v247
    %456 = vmatpush1.msra.mxu0 %v246
    %457 = vmatprep.subr.mxu0 %v251
    %458 = vmatpush1.msra.mxu0 %v250
    %459 = vmatprep.subr.mxu0 %v255
    %460 = vmatpush1.msra.mxu0 %v254
    %461 = vmatprep.subr.mxu0 %v259
    %462 = vmatpush1.msra.mxu0 %v258
    %463 = vmatprep.subr.mxu0 %v263
    %464 = vmatpush1.msra.mxu0 %v262
    %465 = vmatprep.subr.mxu0 %v267
    %466 = vmatpush1.msra.mxu0 %v266
    %467 = vmatprep.subr.mxu0 %v271
    %468 = vmatpush1.msra.mxu0 %v270
    %469 = vmatprep.subr.mxu0 %v275
    %470 = vmatpush1.msra.mxu0 %v274
    %471 = vmatprep.subr.mxu0 %v279
    %472 = vmatpush1.msra.mxu0 %v278
    %473 = vmatprep.subr.mxu0 %v283
    %474 = vmatpush1.msra.mxu0 %v282
    %475 = vmatprep.subr.mxu0 %v287
    %476 = vmatpush1.msra.mxu0 %v286
    %477 = vmatprep.subr.mxu0 %v291
    %478 = vmatpush1.msra.mxu0 %v290
    %479 = vmatprep.subr.mxu0 %v295
    %480 = vmatpush1.msra.mxu0 %v294
    %481 = vmatprep.subr.mxu0 %v299
    %482 = vmatpush1.msra.mxu0 %v298
    %483 = vmatprep.subr.mxu0 %v303
    %484 = vmatpush1.msra.mxu0 %v302
    %485 = vmatprep.subr.mxu0 %v307
    %486 = vmatpush1.msra.mxu0 %v306
    %487 = vmatprep.subr.mxu0 %v311
    %488 = vmatpush1.msra.mxu0 %v310
    %489 = vmatprep.subr.mxu0 %v315
    %490 = vmatpush1.msra.mxu0 %v314
    %491 = vmatprep.subr.mxu0 %v319
    %492 = vmatpush1.msra.mxu0 %v318
    %493 = vmatprep.subr.mxu0 %v323
    %494 = vmatpush1.msra.mxu0 %v322
    %495 = vmatprep.subr.mxu0 %v327
    %496 = vmatpush1.msra.mxu0 %v326
    %497 = vmatprep.subr.mxu0 %v331
    %498 = vmatpush1.msra.mxu0 %v330
    %499 = vmatprep.subr.mxu0 %v335
    %500 = vmatpush1.msra.mxu0 %v334
    %501 = vmatprep.subr.mxu0 %v339
    %502 = vmatpush1.msra.mxu0 %v338
    %503 = vmatprep.subr.mxu0 %v343
    %504 = vmatpush1.msra.mxu0 %v342
    %505 = vmatprep.subr.mxu0 %v347
    %506 = vmatpush1.msra.mxu0 %v346
    %507 = vmatprep.subr.mxu0 %v351
    %508 = vmatpush1.msra.mxu0 %v350
    %509 = vmatprep.mubr.f32.mxu0 %v223
    %510 = vmatmul.mubr.f32.gmra.mrb[0].mxu0 %v222
    %v511 = vpop.f32.mrb[0].mxu0
    %v512 = vadd.f32 %v365, %v511
    %v513 = vpop.f32.mrb[0].mxu0
    %v514 = vadd.f32 %v369, %v513
    %515 = vdwg.mxu0
    %v516 = vmax.f32 %v441, 0.0
    %v517 = vmax.f32 %v443, 0.0
    %v518 = vmax.f32 %v512, 0.0
    %v519 = vmax.f32 %v514, 0.0
    %v520 = vld [vmem:[#allocation6] sm:$0xff]
    %v521 = vld [vmem:[#allocation6 + $0x8] sm:$0xff]
    %v522 = vld [vmem:[#allocation6 + $0x10] sm:$0xff]
    %v523 = vld [vmem:[#allocation6 + $0x18] sm:$0xff]
    %v524 = vld [vmem:[#allocation6 + $0x20] sm:$0xff]
    %v525 = vld [vmem:[#allocation6 + $0x28] sm:$0xff]
    %v526 = vld [vmem:[#allocation6 + $0x30] sm:$0xff]
    %v527 = vld [vmem:[#allocation6 + $0x38] sm:$0xff]
    %v528 = vld [vmem:[#allocation6 + $0x40] sm:$0xff]
    %v529 = vld [vmem:[#allocation6 + $0x48] sm:$0xff]
    %v530 = vld [vmem:[#allocation6 + $0x50] sm:$0xff]
    %v531 = vld [vmem:[#allocation6 + $0x58] sm:$0xff]
    %v532 = vld [vmem:[#allocation6 + $0x60] sm:$0xff]
    %v533 = vld [vmem:[#allocation6 + $0x68] sm:$0xff]
    %v534 = vld [vmem:[#allocation6 + $0x70] sm:$0xff]
    %v535 = vld [vmem:[#allocation6 + $0x78] sm:$0xff]
    %v536 = vld [vmem:[#allocation6 + $0x80] sm:$0xff]
    %v537 = vld [vmem:[#allocation6 + $0x88] sm:$0xff]
    %v538 = vld [vmem:[#allocation6 + $0x90] sm:$0xff]
    %v539 = vld [vmem:[#allocation6 + $0x98] sm:$0xff]
    %v540 = vld [vmem:[#allocation6 + $0xa0] sm:$0xff]
    %v541 = vld [vmem:[#allocation6 + $0xa8] sm:$0xff]
    %v542 = vld [vmem:[#allocation6 + $0xb0] sm:$0xff]
    %v543 = vld [vmem:[#allocation6 + $0xb8] sm:$0xff]
    %v544 = vld [vmem:[#allocation6 + $0xc0] sm:$0xff]
    %v545 = vld [vmem:[#allocation6 + $0xc8] sm:$0xff]
    %v546 = vld [vmem:[#allocation6 + $0xd0] sm:$0xff]
    %v547 = vld [vmem:[#allocation6 + $0xd8] sm:$0xff]
    %v548 = vld [vmem:[#allocation6 + $0xe0] sm:$0xff]
    %v549 = vld [vmem:[#allocation6 + $0xe8] sm:$0xff]
    %v550 = vld [vmem:[#allocation6 + $0xf0] sm:$0xff]
    %v551 = vld [vmem:[#allocation6 + $0xf8] sm:$0xff]
    %v552 = vld [vmem:[#allocation6 + $0x100] sm:$0xff]
    %v553 = vld [vmem:[#allocation6 + $0x108] sm:$0xff]
    %v554 = vld [vmem:[#allocation6 + $0x110] sm:$0xff]
    %v555 = vld [vmem:[#allocation6 + $0x118] sm:$0xff]
    %v556 = vld [vmem:[#allocation6 + $0x120] sm:$0xff]
    %v557 = vld [vmem:[#allocation6 + $0x128] sm:$0xff]
    %v558 = vld [vmem:[#allocation6 + $0x130] sm:$0xff]
    %v559 = vld [vmem:[#allocation6 + $0x138] sm:$0xff]
    %v560 = vld [vmem:[#allocation6 + $0x140] sm:$0xff]
    %v561 = vld [vmem:[#allocation6 + $0x148] sm:$0xff]
    %v562 = vld [vmem:[#allocation6 + $0x150] sm:$0xff]
    %v563 = vld [vmem:[#allocation6 + $0x158] sm:$0xff]
    %v564 = vld [vmem:[#allocation6 + $0x160] sm:$0xff]
    %v565 = vld [vmem:[#allocation6 + $0x168] sm:$0xff]
    %v566 = vld [vmem:[#allocation6 + $0x170] sm:$0xff]
    %v567 = vld [vmem:[#allocation6 + $0x178] sm:$0xff]
    %v568 = vld [vmem:[#allocation6 + $0x180] sm:$0xff]
    %v569 = vld [vmem:[#allocation6 + $0x188] sm:$0xff]
    %v570 = vld [vmem:[#allocation6 + $0x190] sm:$0xff]
    %v571 = vld [vmem:[#allocation6 + $0x198] sm:$0xff]
    %v572 = vld [vmem:[#allocation6 + $0x1a0] sm:$0xff]
    %v573 = vld [vmem:[#allocation6 + $0x1a8] sm:$0xff]
    %v574 = vld [vmem:[#allocation6 + $0x1b0] sm:$0xff]
    %v575 = vld [vmem:[#allocation6 + $0x1b8] sm:$0xff]
    %v576 = vld [vmem:[#allocation6 + $0x1c0] sm:$0xff]
    %v577 = vld [vmem:[#allocation6 + $0x1c8] sm:$0xff]
    %v578 = vld [vmem:[#allocation6 + $0x1d0] sm:$0xff]
    %v579 = vld [vmem:[#allocation6 + $0x1d8] sm:$0xff]
    %v580 = vld [vmem:[#allocation6 + $0x1e0] sm:$0xff]
    %v581 = vld [vmem:[#allocation6 + $0x1e8] sm:$0xff]
    %v582 = vld [vmem:[#allocation6 + $0x1f0] sm:$0xff]
    %v583 = vld [vmem:[#allocation6 + $0x1f8] sm:$0xff]
    %v584 = vld [vmem:[#allocation6 + $0x200] sm:$0xff]
    %v585 = vld [vmem:[#allocation6 + $0x208] sm:$0xff]
    %v586 = vld [vmem:[#allocation6 + $0x210] sm:$0xff]
    %v587 = vld [vmem:[#allocation6 + $0x218] sm:$0xff]
    %v588 = vld [vmem:[#allocation6 + $0x220] sm:$0xff]
    %v589 = vld [vmem:[#allocation6 + $0x228] sm:$0xff]
    %v590 = vld [vmem:[#allocation6 + $0x230] sm:$0xff]
    %v591 = vld [vmem:[#allocation6 + $0x238] sm:$0xff]
    %v592 = vld [vmem:[#allocation6 + $0x240] sm:$0xff]
    %v593 = vld [vmem:[#allocation6 + $0x248] sm:$0xff]
    %v594 = vld [vmem:[#allocation6 + $0x250] sm:$0xff]
    %v595 = vld [vmem:[#allocation6 + $0x258] sm:$0xff]
    %v596 = vld [vmem:[#allocation6 + $0x260] sm:$0xff]
    %v597 = vld [vmem:[#allocation6 + $0x268] sm:$0xff]
    %v598 = vld [vmem:[#allocation6 + $0x270] sm:$0xff]
    %v599 = vld [vmem:[#allocation6 + $0x278] sm:$0xff]
    %v600 = vld [vmem:[#allocation6 + $0x280] sm:$0xff]
    %v601 = vld [vmem:[#allocation6 + $0x288] sm:$0xff]
    %v602 = vld [vmem:[#allocation6 + $0x290] sm:$0xff]
    %v603 = vld [vmem:[#allocation6 + $0x298] sm:$0xff]
    %v604 = vld [vmem:[#allocation6 + $0x2a0] sm:$0xff]
    %v605 = vld [vmem:[#allocation6 + $0x2a8] sm:$0xff]
    %v606 = vld [vmem:[#allocation6 + $0x2b0] sm:$0xff]
    %v607 = vld [vmem:[#allocation6 + $0x2b8] sm:$0xff]
    %v608 = vld [vmem:[#allocation6 + $0x2c0] sm:$0xff]
    %v609 = vld [vmem:[#allocation6 + $0x2c8] sm:$0xff]
    %v610 = vld [vmem:[#allocation6 + $0x2d0] sm:$0xff]
    %v611 = vld [vmem:[#allocation6 + $0x2d8] sm:$0xff]
    %v612 = vld [vmem:[#allocation6 + $0x2e0] sm:$0xff]
    %v613 = vld [vmem:[#allocation6 + $0x2e8] sm:$0xff]
    %v614 = vld [vmem:[#allocation6 + $0x2f0] sm:$0xff]
    %v615 = vld [vmem:[#allocation6 + $0x2f8] sm:$0xff]
    %v616 = vld [vmem:[#allocation6 + $0x300] sm:$0xff]
    %v617 = vld [vmem:[#allocation6 + $0x308] sm:$0xff]
    %v618 = vld [vmem:[#allocation6 + $0x310] sm:$0xff]
    %v619 = vld [vmem:[#allocation6 + $0x318] sm:$0xff]
    %v620 = vld [vmem:[#allocation6 + $0x320] sm:$0xff]
    %v621 = vld [vmem:[#allocation6 + $0x328] sm:$0xff]
    %v622 = vld [vmem:[#allocation6 + $0x330] sm:$0xff]
    %v623 = vld [vmem:[#allocation6 + $0x338] sm:$0xff]
    %v624 = vld [vmem:[#allocation6 + $0x340] sm:$0xff]
    %v625 = vld [vmem:[#allocation6 + $0x348] sm:$0xff]
    %v626 = vld [vmem:[#allocation6 + $0x350] sm:$0xff]
    %v627 = vld [vmem:[#allocation6 + $0x358] sm:$0xff]
    %v628 = vld [vmem:[#allocation6 + $0x360] sm:$0xff]
    %v629 = vld [vmem:[#allocation6 + $0x368] sm:$0xff]
    %v630 = vld [vmem:[#allocation6 + $0x370] sm:$0xff]
    %v631 = vld [vmem:[#allocation6 + $0x378] sm:$0xff]
    %v632 = vld [vmem:[#allocation6 + $0x380] sm:$0xff]
    %v633 = vld [vmem:[#allocation6 + $0x388] sm:$0xff]
    %v634 = vld [vmem:[#allocation6 + $0x390] sm:$0xff]
    %v635 = vld [vmem:[#allocation6 + $0x398] sm:$0xff]
    %v636 = vld [vmem:[#allocation6 + $0x3a0] sm:$0xff]
    %v637 = vld [vmem:[#allocation6 + $0x3a8] sm:$0xff]
    %v638 = vld [vmem:[#allocation6 + $0x3b0] sm:$0xff]
    %v639 = vld [vmem:[#allocation6 + $0x3b8] sm:$0xff]
    %v640 = vld [vmem:[#allocation6 + $0x3c0] sm:$0xff]
    %v641 = vld [vmem:[#allocation6 + $0x3c8] sm:$0xff]
    %v642 = vld [vmem:[#allocation6 + $0x3d0] sm:$0xff]
    %v643 = vld [vmem:[#allocation6 + $0x3d8] sm:$0xff]
    %v644 = vld [vmem:[#allocation6 + $0x3e0] sm:$0xff]
    %v645 = vld [vmem:[#allocation6 + $0x3e8] sm:$0xff]
    %v646 = vld [vmem:[#allocation6 + $0x3f0] sm:$0xff]
    %v647 = vld [vmem:[#allocation6 + $0x3f8] sm:$0xff]
    %v648 = vld [vmem:[%s6] sm:$0x3]
    %v650 = vlaneseq
    %v651 = vshrl.u32 %v650, 7
    %v652 = vsub.s32 0, %v651
    %v653 = vrot.slane %v648, %v652
    %v654 = vlaneseq
    %v655 = vshrl.u32 %v654, 7
    %v656 = vsub.s32 1, %v655
    %v657 = vrot.slane %v648, %v656
    %660 = vmatprep.subr.mxu0 %v521
    %661 = vmatpush1.msra.mxu0 %v520
    %662 = vmatprep.subr.mxu0 %v523
    %663 = vmatpush1.msra.mxu0 %v522
    %664 = vmatprep.subr.mxu0 %v525
    %665 = vmatpush1.msra.mxu0 %v524
    %666 = vmatprep.subr.mxu0 %v527
    %667 = vmatpush1.msra.mxu0 %v526
    %668 = vmatprep.subr.mxu0 %v529
    %669 = vmatpush1.msra.mxu0 %v528
    %670 = vmatprep.subr.mxu0 %v531
    %671 = vmatpush1.msra.mxu0 %v530
    %672 = vmatprep.subr.mxu0 %v533
    %673 = vmatpush1.msra.mxu0 %v532
    %674 = vmatprep.subr.mxu0 %v535
    %675 = vmatpush1.msra.mxu0 %v534
    %676 = vmatprep.subr.mxu0 %v537
    %677 = vmatpush1.msra.mxu0 %v536
    %678 = vmatprep.subr.mxu0 %v539
    %679 = vmatpush1.msra.mxu0 %v538
    %680 = vmatprep.subr.mxu0 %v541
    %681 = vmatpush1.msra.mxu0 %v540
    %682 = vmatprep.subr.mxu0 %v543
    %683 = vmatpush1.msra.mxu0 %v542
    %684 = vmatprep.subr.mxu0 %v545
    %685 = vmatpush1.msra.mxu0 %v544
    %686 = vmatprep.subr.mxu0 %v547
    %687 = vmatpush1.msra.mxu0 %v546
    %688 = vmatprep.subr.mxu0 %v549
    %689 = vmatpush1.msra.mxu0 %v548
    %690 = vmatprep.subr.mxu0 %v551
    %691 = vmatpush1.msra.mxu0 %v550
    %692 = vmatprep.subr.mxu0 %v553
    %693 = vmatpush1.msra.mxu0 %v552
    %694 = vmatprep.subr.mxu0 %v555
    %695 = vmatpush1.msra.mxu0 %v554
    %696 = vmatprep.subr.mxu0 %v557
    %697 = vmatpush1.msra.mxu0 %v556
    %698 = vmatprep.subr.mxu0 %v559
    %699 = vmatpush1.msra.mxu0 %v558
    %700 = vmatprep.subr.mxu0 %v561
    %701 = vmatpush1.msra.mxu0 %v560
    %702 = vmatprep.subr.mxu0 %v563
    %703 = vmatpush1.msra.mxu0 %v562
    %704 = vmatprep.subr.mxu0 %v565
    %705 = vmatpush1.msra.mxu0 %v564
    %706 = vmatprep.subr.mxu0 %v567
    %707 = vmatpush1.msra.mxu0 %v566
    %708 = vmatprep.subr.mxu0 %v569
    %709 = vmatpush1.msra.mxu0 %v568
    %710 = vmatprep.subr.mxu0 %v571
    %711 = vmatpush1.msra.mxu0 %v570
    %712 = vmatprep.subr.mxu0 %v573
    %713 = vmatpush1.msra.mxu0 %v572
    %714 = vmatprep.subr.mxu0 %v575
    %715 = vmatpush1.msra.mxu0 %v574
    %716 = vmatprep.subr.mxu0 %v577
    %717 = vmatpush1.msra.mxu0 %v576
    %718 = vmatprep.subr.mxu0 %v579
    %719 = vmatpush1.msra.mxu0 %v578
    %720 = vmatprep.subr.mxu0 %v581
    %721 = vmatpush1.msra.mxu0 %v580
    %722 = vmatprep.subr.mxu0 %v583
    %723 = vmatpush1.msra.mxu0 %v582
    %724 = vmatprep.mubr.f32.mxu0 %v517
    %725 = vmatmul.mubr.f32.gmra.mrb[0].mxu0 %v516
    %v726 = vpop.f32.mrb[0].mxu0
    %v727 = vadd.f32 %v653, %v726
    %v728 = vpop.f32.mrb[0].mxu0
    %v729 = vadd.f32 %v657, %v728
    %730 = vdwg.mxu0
    %731 = vmatprep.subr.mxu0 %v585
    %732 = vmatpush1.msra.mxu0 %v584
    %733 = vmatprep.subr.mxu0 %v587
    %734 = vmatpush1.msra.mxu0 %v586
    %735 = vmatprep.subr.mxu0 %v589
    %736 = vmatpush1.msra.mxu0 %v588
    %737 = vmatprep.subr.mxu0 %v591
    %738 = vmatpush1.msra.mxu0 %v590
    %739 = vmatprep.subr.mxu0 %v593
    %740 = vmatpush1.msra.mxu0 %v592
    %741 = vmatprep.subr.mxu0 %v595
    %742 = vmatpush1.msra.mxu0 %v594
    %743 = vmatprep.subr.mxu0 %v597
    %744 = vmatpush1.msra.mxu0 %v596
    %745 = vmatprep.subr.mxu0 %v599
    %746 = vmatpush1.msra.mxu0 %v598
    %747 = vmatprep.subr.mxu0 %v601
    %748 = vmatpush1.msra.mxu0 %v600
    %749 = vmatprep.subr.mxu0 %v603
    %750 = vmatpush1.msra.mxu0 %v602
    %751 = vmatprep.subr.mxu0 %v605
    %752 = vmatpush1.msra.mxu0 %v604
    %753 = vmatprep.subr.mxu0 %v607
    %754 = vmatpush1.msra.mxu0 %v606
    %755 = vmatprep.subr.mxu0 %v609
    %756 = vmatpush1.msra.mxu0 %v608
    %757 = vmatprep.subr.mxu0 %v611
    %758 = vmatpush1.msra.mxu0 %v610
    %759 = vmatprep.subr.mxu0 %v613
    %760 = vmatpush1.msra.mxu0 %v612
    %761 = vmatprep.subr.mxu0 %v615
    %762 = vmatpush1.msra.mxu0 %v614
    %763 = vmatprep.subr.mxu0 %v617
    %764 = vmatpush1.msra.mxu0 %v616
    %765 = vmatprep.subr.mxu0 %v619
    %766 = vmatpush1.msra.mxu0 %v618
    %767 = vmatprep.subr.mxu0 %v621
    %768 = vmatpush1.msra.mxu0 %v620
    %769 = vmatprep.subr.mxu0 %v623
    %770 = vmatpush1.msra.mxu0 %v622
    %771 = vmatprep.subr.mxu0 %v625
    %772 = vmatpush1.msra.mxu0 %v624
    %773 = vmatprep.subr.mxu0 %v627
    %774 = vmatpush1.msra.mxu0 %v626
    %775 = vmatprep.subr.mxu0 %v629
    %776 = vmatpush1.msra.mxu0 %v628
    %777 = vmatprep.subr.mxu0 %v631
    %778 = vmatpush1.msra.mxu0 %v630
    %779 = vmatprep.subr.mxu0 %v633
    %780 = vmatpush1.msra.mxu0 %v632
    %781 = vmatprep.subr.mxu0 %v635
    %782 = vmatpush1.msra.mxu0 %v634
    %783 = vmatprep.subr.mxu0 %v637
    %784 = vmatpush1.msra.mxu0 %v636
    %785 = vmatprep.subr.mxu0 %v639
    %786 = vmatpush1.msra.mxu0 %v638
    %787 = vmatprep.subr.mxu0 %v641
    %788 = vmatpush1.msra.mxu0 %v640
    %789 = vmatprep.subr.mxu0 %v643
    %790 = vmatpush1.msra.mxu0 %v642
    %791 = vmatprep.subr.mxu0 %v645
    %792 = vmatpush1.msra.mxu0 %v644
    %793 = vmatprep.subr.mxu0 %v647
    %794 = vmatpush1.msra.mxu0 %v646
    %795 = vmatprep.mubr.f32.mxu0 %v519
    %796 = vmatmul.mubr.f32.gmra.mrb[0].mxu0 %v518
    %v797 = vpop.f32.mrb[0].mxu0
    %v798 = vadd.f32 %v727, %v797
    %v799 = vpop.f32.mrb[0].mxu0
    %v800 = vadd.f32 %v729, %v799
    %801 = vdwg.mxu0
    %v802 = vmax.f32 %v798, 0.0
    %v803 = vmax.f32 %v800, 0.0
    %v804 = vld [vmem:[%s7] sm:$0xff]
    %v805 = vld [vmem:[%s7 + $0x8] sm:$0xff]
    %v806 = vld [vmem:[%s7 + $0x10] sm:$0xff]
    %v807 = vld [vmem:[%s7 + $0x18] sm:$0xff]
    %v808 = vld [vmem:[%s7 + $0x20] sm:$0xff]
    %v809 = vld [vmem:[%s7 + $0x28] sm:$0xff]
    %v810 = vld [vmem:[%s7 + $0x30] sm:$0xff]
    %v811 = vld [vmem:[%s7 + $0x38] sm:$0xff]
    %v812 = vld [vmem:[%s7 + $0x40] sm:$0xff]
    %v813 = vld [vmem:[%s7 + $0x48] sm:$0xff]
    %v814 = vld [vmem:[%s7 + $0x50] sm:$0xff]
    %v815 = vld [vmem:[%s7 + $0x58] sm:$0xff]
    %v816 = vld [vmem:[%s7 + $0x60] sm:$0xff]
    %v817 = vld [vmem:[%s7 + $0x68] sm:$0xff]
    %v818 = vld [vmem:[%s7 + $0x70] sm:$0xff]
    %v819 = vld [vmem:[%s7 + $0x78] sm:$0xff]
    %v820 = vld [vmem:[%s7 + $0x80] sm:$0xff]
    %v821 = vld [vmem:[%s7 + $0x88] sm:$0xff]
    %v822 = vld [vmem:[%s7 + $0x90] sm:$0xff]
    %v823 = vld [vmem:[%s7 + $0x98] sm:$0xff]
    %v824 = vld [vmem:[%s7 + $0xa0] sm:$0xff]
    %v825 = vld [vmem:[%s7 + $0xa8] sm:$0xff]
    %v826 = vld [vmem:[%s7 + $0xb0] sm:$0xff]
    %v827 = vld [vmem:[%s7 + $0xb8] sm:$0xff]
    %v828 = vld [vmem:[%s7 + $0xc0] sm:$0xff]
    %v829 = vld [vmem:[%s7 + $0xc8] sm:$0xff]
    %v830 = vld [vmem:[%s7 + $0xd0] sm:$0xff]
    %v831 = vld [vmem:[%s7 + $0xd8] sm:$0xff]
    %v832 = vld [vmem:[%s7 + $0xe0] sm:$0xff]
    %v833 = vld [vmem:[%s7 + $0xe8] sm:$0xff]
    %v834 = vld [vmem:[%s7 + $0xf0] sm:$0xff]
    %v835 = vld [vmem:[%s7 + $0xf8] sm:$0xff]
    %v836 = vld [vmem:[%s8] sm:$0x1]
    %v838 = vlaneseq
    %v839 = vshrl.u32 %v838, 7
    %v840 = vsub.s32 0, %v839
    %v841 = vrot.slane %v836, %v840
    %843 = vmatprep.subr.mxu0 0.0
    %844 = vmatpush1.msra.mxu0 %v804
    %845 = vmatprep.subr.mxu0 0.0
    %846 = vmatpush1.msra.mxu0 %v805
    %847 = vmatprep.subr.mxu0 0.0
    %848 = vmatpush1.msra.mxu0 %v806
    %849 = vmatprep.subr.mxu0 0.0
    %850 = vmatpush1.msra.mxu0 %v807
    %851 = vmatprep.subr.mxu0 0.0
    %852 = vmatpush1.msra.mxu0 %v808
    %853 = vmatprep.subr.mxu0 0.0
    %854 = vmatpush1.msra.mxu0 %v809
    %855 = vmatprep.subr.mxu0 0.0
    %856 = vmatpush1.msra.mxu0 %v810
    %857 = vmatprep.subr.mxu0 0.0
    %858 = vmatpush1.msra.mxu0 %v811
    %859 = vmatprep.subr.mxu0 0.0
    %860 = vmatpush1.msra.mxu0 %v812
    %861 = vmatprep.subr.mxu0 0.0
    %862 = vmatpush1.msra.mxu0 %v813
    %863 = vmatprep.subr.mxu0 0.0
    %864 = vmatpush1.msra.mxu0 %v814
    %865 = vmatprep.subr.mxu0 0.0
    %866 = vmatpush1.msra.mxu0 %v815
    %867 = vmatprep.subr.mxu0 0.0
    %868 = vmatpush1.msra.mxu0 %v816
    %869 = vmatprep.subr.mxu0 0.0
    %870 = vmatpush1.msra.mxu0 %v817
    %871 = vmatprep.subr.mxu0 0.0
    %872 = vmatpush1.msra.mxu0 %v818
    %873 = vmatprep.subr.mxu0 0.0
    %874 = vmatpush1.msra.mxu0 %v819
    %875 = vmatprep.subr.mxu0 0.0
    %876 = vmatpush1.msra.mxu0 %v820
    %877 = vmatprep.subr.mxu0 0.0
    %878 = vmatpush1.msra.mxu0 %v821
    %879 = vmatprep.subr.mxu0 0.0
    %880 = vmatpush1.msra.mxu0 %v822
    %881 = vmatprep.subr.mxu0 0.0
    %882 = vmatpush1.msra.mxu0 %v823
    %883 = vmatprep.subr.mxu0 0.0
    %884 = vmatpush1.msra.mxu0 %v824
    %885 = vmatprep.subr.mxu0 0.0
    %886 = vmatpush1.msra.mxu0 %v825
    %887 = vmatprep.subr.mxu0 0.0
    %888 = vmatpush1.msra.mxu0 %v826
    %889 = vmatprep.subr.mxu0 0.0
    %890 = vmatpush1.msra.mxu0 %v827
    %891 = vmatprep.subr.mxu0 0.0
    %892 = vmatpush1.msra.mxu0 %v828
    %893 = vmatprep.subr.mxu0 0.0
    %894 = vmatpush1.msra.mxu0 %v829
    %895 = vmatprep.subr.mxu0 0.0
    %896 = vmatpush1.msra.mxu0 %v830
    %897 = vmatprep.subr.mxu0 0.0
    %898 = vmatpush1.msra.mxu0 %v831
    %899 = vmatprep.subr.mxu0 0.0
    %900 = vmatpush1.msra.mxu0 %v832
    %901 = vmatprep.subr.mxu0 0.0
    %902 = vmatpush1.msra.mxu0 %v833
    %903 = vmatprep.subr.mxu0 0.0
    %904 = vmatpush1.msra.mxu0 %v834
    %905 = vmatprep.subr.mxu0 0.0
    %906 = vmatpush1.msra.mxu0 %v835
    %907 = vmatprep.mubr.f32.mxu0 %v803
    %908 = vmatmul.mubr.f32.gmra.mrb[0].mxu0 %v802
    %v909 = vpop.f32.mrb[0].mxu0
    %v910 = vadd.f32 %v841, %v909
    %v911 = vpop.f32.mrb[0].mxu0
    %912 = vdwg.mxu0
    %913 = vst [vmem:[%s9] sm:$0xff] %v910
    // Predicated region
    $region50: #{net_forward.1} parent=1 // pred_check
      _
    $region51: #{net_forward.1} parent=1 // pred_check_branch
      %915 = sbr.rel (0) target = $region53
    $region52: #{net_forward.1} parent=1 // pred_region
      _
    $region53: #{net_forward.1} parent=1 // pred_fallthru
      _
    // Predicated region
    $region54: #{net_forward.1} parent=1 // pred_check
      _
    $region55: #{net_forward.1} parent=1 // pred_check_branch
      %917 = sbr.rel (0) target = $region57
    $region56: #{net_forward.1} parent=1 // pred_region
      _
    $region57: #{net_forward.1} parent=1 // pred_fallthru
      _
    %918 = vsyncpa [#allocation3], 1
    %919 = vsyncpa [#allocation5], 1

</llo_original>
